<compile_context>
chip_gen: v7x
topology: tpu7x:2x2x1
jax: 0.10.0
libtpu: 0.0.40
codegen_flags: <defaults>
</compile_context>

<pallas_src>
import functools

import jax
import jax.numpy as jnp
import numpy as np
from jax.experimental import pallas as pl
from jax.experimental.pallas import tpu as pltpu


# --------------------------------------------------------------------------
# Pallas kernel: whole sandglass block on one lane-packed (C, B_tile*L) slab.
# --------------------------------------------------------------------------
def _sandglass_kernel(*refs, residual: bool, stride: int, seg_len: int):
    if stride > 1:
        x_ref, pin_ref, w_ref, pout_ref, sel_ref, o_ref = refs
    else:
        x_ref, pin_ref, w_ref, pout_ref, o_ref = refs
        sel_ref = None

    x = x_ref[...]                       # (C_in, T) f32, T = B_tile * L
    T = x.shape[1]

    # Zero-padding masks at every per-sample boundary, computed ONCE and reused
    # by both depthwise convs; (1, T) masks broadcast over channels (sublanes).
    pos = jax.lax.broadcasted_iota(jnp.int32, (1, T), 1) % seg_len
    at_start = pos == 0                  # the x[l-1] tap is zero-padded here
    at_end = pos == seg_len - 1          # the x[l+1] tap is zero-padded here

    def dwconv3(v, w3):                  # v: (C, T), w3: (C, 3)
        # Depthwise conv1d, kernel=3, stride=1, zero padding=1 per sample.
        # pltpu.roll is circular; the wrapped-in lanes land exactly on the
        # masked positions, so samples packed along lanes never mix.
        v_prev = jnp.where(at_start, 0.0, pltpu.roll(v, 1, 1))       # x[l-1]
        v_next = jnp.where(at_end, 0.0, pltpu.roll(v, T - 1, 1))     # x[l+1]
        return w3[:, 0:1] * v_prev + w3[:, 1:2] * v + w3[:, 2:3] * v_next

    pin = pin_ref[...]                   # (C_in, 5):  [dw1 | bn1_s | bn1_b]
    pout = pout_ref[...]                 # (C_out, 6): [dw2 | bn4_s | bn4_b | b_pw]

    # 1) depthwise 3-tap + BN + ReLU
    h = dwconv3(x, pin[:, 0:3])
    h = jnp.maximum(h * pin[:, 3:4] + pin[:, 4:5], 0.0)

    # 2+3) both 1x1 convs and the BN between them, host-folded into one
    #      (C_out, C_in) matmul + bias, then ReLU.                     -> MXU
    h = jnp.dot(w_ref[...], h, preferred_element_type=jnp.float32)
    h = jnp.maximum(h + pout[:, 5:6], 0.0)

    # 4) depthwise 3-tap; stride folded in-kernel via a constant 0/1 selection
    #    matmul (only the dense strided output is written back), then BN.
    h = dwconv3(h, pout[:, 0:3])
    if stride > 1:
        h = jnp.dot(h, sel_ref[...], preferred_element_type=jnp.float32)
    h = h * pout[:, 3:4] + pout[:, 4:5]

    if residual:                         # only possible when stride == 1
        h = h + x
    o_ref[...] = h.astype(o_ref.dtype)


# --------------------------------------------------------------------------
# Tiling / parameter helpers
# --------------------------------------------------------------------------
def _choose_batch_tile(N, L, L_out, max_lanes=4096):
    """Samples per grid step: lane-dense (>= 256 lanes for the 256-wide MXU on
    v6e/v7x) while keeping >= 2 grid steps when possible (both v7x TensorCores
    busy), (8,128)-aligned blocks and a bounded VMEM working set."""
    divisors = [b for b in range(1, N + 1) if N % b == 0]

    def aligned(b):
        return N // b == 1 or (b * L % 128 == 0 and b * L_out % 128 == 0)

    for b in divisors:
        if aligned(b) and b * L >= 256 and N // b >= 2 and b * L <= max_lanes:
            return b
    good = [b for b in divisors if aligned(b) and b * L <= max_lanes]
    if good:
        return good[-1]
    return next(b for b in divisors if aligned(b))


def _make_stride_selector(b_tile, L, stride):
    """(B_tile*L, B_tile*L_out) 0/1 matrix selecting every stride-th position
    within each sample of the lane-packed slab."""
    L_out = L // stride
    T, T_out = b_tile * L, b_tile * L_out
    cols = np.arange(T_out)
    rows = (cols // L_out) * L + stride * (cols % L_out)
    sel = np.zeros((T, T_out), dtype=np.float32)
    sel[rows, cols] = 1.0
    return jnp.asarray(sel)


# --------------------------------------------------------------------------
# Wrapper
# --------------------------------------------------------------------------
def sandglass_block(x, params, *, stride: int, residual: bool):
    """x: (N, C_in, L) f32.  params: raw conv weights + folded BN scale/bias."""
    N, C_in, L = x.shape
    C_out = params["pw2_w"].shape[0]
    assert L % stride == 0, "wrapper assumes L divisible by stride"
    L_out = L // stride
    if residual:
        assert stride == 1 and C_in == C_out

    hi = jax.lax.Precision.HIGHEST
    # ---- host-side algebraic folds (f32, full precision) --------------------
    # pw2 . BN2 . pw1 has no nonlinearity in between -> one matmul + bias.
    w_pw = params["bn3_s"] * jnp.dot(
        params["pw2_w"], params["bn2_s"] * params["pw1_w"], precision=hi)
    b_pw = (params["bn3_s"] * jnp.dot(params["pw2_w"], params["bn2_b"],
                                      precision=hi) + params["bn3_b"])
    # Pack the per-channel tensors into two small VMEM-resident slabs.
    pin = jnp.concatenate(
        [params["dw1_w"], params["bn1_s"], params["bn1_b"]], axis=1)  # (C_in, 5)
    pout = jnp.concatenate(
        [params["dw2_w"], params["bn4_s"], params["bn4_b"], b_pw],
        axis=1)                                                       # (C_out, 6)

    # ---- batch folding: (N, C, L) -> lane-packed (C, N*L) slab --------------
    b_tile = _choose_batch_tile(N, L, L_out)
    n_tiles = N // b_tile
    tile_t, tile_to = b_tile * L, b_tile * L_out
    x_packed = jnp.transpose(x, (1, 0, 2)).reshape(C_in, N * L)

    inputs = [x_packed, pin, w_pw, pout]
    in_specs = [
        pl.BlockSpec((C_in, tile_t), lambda i: (0, i)),
        pl.BlockSpec(pin.shape, lambda i: (0, 0)),
        pl.BlockSpec(w_pw.shape, lambda i: (0, 0)),
        pl.BlockSpec(pout.shape, lambda i: (0, 0)),
    ]
    sel_bytes = 0
    if stride > 1:
        sel = _make_stride_selector(b_tile, L, stride)
        inputs.append(sel)
        in_specs.append(pl.BlockSpec(sel.shape, lambda i: (0, 0)))
        sel_bytes = int(sel.size) * 4

    # Explicit VMEM budget (activations in/intermediate/out x double buffering
    # + resident params) -- stays far below v7x's 64 MiB ceiling at these sizes.
    work_bytes = 4 * (C_in * tile_t + 2 * C_out * tile_t + C_out * tile_to
                      + int(pin.size) + int(w_pw.size) + int(pout.size)) + sel_bytes
    vmem_limit = int(min(64 * 2**20, max(16 * 2**20, 8 * work_bytes)))

    kernel = functools.partial(_sandglass_kernel, residual=residual,
                               stride=stride, seg_len=L)

    out_packed = pl.pallas_call(
        kernel,
        out_shape=jax.ShapeDtypeStruct((C_out, N * L_out), x.dtype),
        grid_spec=pltpu.PrefetchScalarGridSpec(
            num_scalar_prefetch=0,
            grid=(n_tiles,),
            in_specs=in_specs,
            out_specs=pl.BlockSpec((C_out, tile_to), lambda i: (0, i)),
        ),
        compiler_params=pltpu.CompilerParams(
            dimension_semantics=("parallel",),
            vmem_limit_bytes=vmem_limit),
    )(*inputs)

    # Unpack lanes back to (N, C_out, L_out) -- pure layout plumbing in XLA.
    return out_packed.reshape(C_out, N, L_out).transpose(1, 0, 2)


# --------------------------------------------------------------------------
# Parameter construction (deterministic) + pure-JAX reference
# --------------------------------------------------------------------------
def make_params(key, in_ch, out_ch, reduction):
    mid = in_ch // reduction
    ks = jax.random.split(key, 8)

    def w(k, shape, fan_in):
        return jax.random.normal(k, shape, jnp.float32) / np.sqrt(fan_in)

    def bn(k, c):
        k1, k2, k3, k4 = jax.random.split(k, 4)
        gamma = 1.0 + 0.1 * jax.random.normal(k1, (c,), jnp.float32)
        beta = 0.1 * jax.random.normal(k2, (c,), jnp.float32)
        mean = 0.1 * jax.random.normal(k3, (c,), jnp.float32)
        var = jnp.abs(jax.random.normal(k4, (c,), jnp.float32)) + 0.5
        scale = gamma / jnp.sqrt(var + 1e-5)
        bias = beta - mean * scale
        return scale.reshape(c, 1), bias.reshape(c, 1)

    p = {}
    p["dw1_w"] = w(ks[0], (in_ch, 3), 3)
    p["bn1_s"], p["bn1_b"] = bn(ks[1], in_ch)
    p["pw1_w"] = w(ks[2], (mid, in_ch), in_ch)
    p["bn2_s"], p["bn2_b"] = bn(ks[3], mid)
    p["pw2_w"] = w(ks[4], (out_ch, mid), mid)
    p["bn3_s"], p["bn3_b"] = bn(ks[5], out_ch)
    p["dw2_w"] = w(ks[6], (out_ch, 3), 3)
    p["bn4_s"], p["bn4_b"] = bn(ks[7], out_ch)
    return p


def reference_forward(x, p, *, stride, residual):
    hi = jax.lax.Precision.HIGHEST

    def dwconv(v, w, s):
        return jax.lax.conv_general_dilated(
            v, w[:, None, :], window_strides=(s,), padding=((1, 1),),
            dimension_numbers=("NCH", "OIH", "NCH"),
            feature_group_count=v.shape[1], precision=hi)

    def bn(v, s, b):
        return v * s[None] + b[None]

    h = jnp.maximum(bn(dwconv(x, p["dw1_w"], 1), p["bn1_s"], p["bn1_b"]), 0.0)
    h = bn(jnp.einsum("oc,ncl->nol", p["pw1_w"], h, precision=hi),
           p["bn2_s"], p["bn2_b"])
    h = jnp.maximum(bn(jnp.einsum("oc,ncl->nol", p["pw2_w"], h, precision=hi),
                       p["bn3_s"], p["bn3_b"]), 0.0)
    h = bn(dwconv(h, p["dw2_w"], stride), p["bn4_s"], p["bn4_b"])
    return h + x if residual else h


# --------------------------------------------------------------------------
if __name__ == "__main__":
    key = jax.random.PRNGKey(0)
    configs = [
        # (in_ch, out_ch, stride, reduction, N, L)
        (32, 32, 1, 4, 4, 128),   # residual branch (in == out, stride 1)
        (32, 48, 2, 4, 4, 128),   # strided, channel-changing branch
    ]
    for in_ch, out_ch, stride, reduction, N, L in configs:
        residual = (in_ch == out_ch) and (stride == 1)
        key, kx, kp = jax.random.split(key, 3)
        x = jax.random.normal(kx, (N, in_ch, L), jnp.float32)
        params = make_params(kp, in_ch, out_ch, reduction)

        out = jax.block_until_ready(
            sandglass_block(x, params, stride=stride, residual=residual))
        ref = jax.block_until_ready(
            reference_forward(x, params, stride=stride, residual=residual))

        assert out.shape == ref.shape, (out.shape, ref.shape)
        # 1e-3 tolerance: MXU multi-pass f32 matmul vs XLA HIGHEST-precision
        # reference round differently; structural errors would be O(1).
        np.testing.assert_allclose(np.asarray(out), np.asarray(ref),
                                   rtol=1e-3, atol=1e-3)
    print("KERNEL_OK")
</pallas_src>

<mosaic_0001>
module attributes {stable_mosaic.version = 11 : i64} {
  func.func @_sandglass_kernel(%arg0: i32, %arg1: memref<32x256xf32, #tpu.memory_space<vmem>>, %arg2: memref<32x5xf32, #tpu.memory_space<vmem>>, %arg3: memref<32x32xf32, #tpu.memory_space<vmem>>, %arg4: memref<32x6xf32, #tpu.memory_space<vmem>>, %arg5: memref<32x256xf32, #tpu.memory_space<vmem>>) attributes {dimension_semantics = [#tpu.dimension_semantics<parallel>], iteration_bounds = array<i64: 2>, scalar_prefetch = 0 : i64, scratch_operands = 0 : i64, tpu.core_type = #tpu.core_type<tc>, window_params = [{transform_indices = @transform_0, window_bounds = array<i64: 32, 256>}, {pipeline_mode = #tpu.pipeline_mode<synchronous>, transform_indices = @transform_1, window_bounds = array<i64: 32, 5>}, {pipeline_mode = #tpu.pipeline_mode<synchronous>, transform_indices = @transform_2, window_bounds = array<i64: 32, 32>}, {pipeline_mode = #tpu.pipeline_mode<synchronous>, transform_indices = @transform_3, window_bounds = array<i64: 32, 6>}, {transform_indices = @transform_4, window_bounds = array<i64: 32, 256>}]} {
    %c0 = arith.constant 0 : index
    %c0_0 = arith.constant 0 : index
    %0 = vector.load %arg1[%c0, %c0_0] : memref<32x256xf32, #tpu.memory_space<vmem>>, vector<32x256xf32>
    %1 = tpu.iota {dimensions = array<i32: 1>} : vector<1x256xi32>
    %c128_i32 = arith.constant 128 : i32
    %c0_i32 = arith.constant 0 : i32
    %2 = arith.cmpi eq, %c128_i32, %c0_i32 : i32
    %c1_i32 = arith.constant 1 : i32
    %3 = arith.select %2, %c1_i32, %c128_i32 : i32
    %4 = vector.broadcast %3 : i32 to vector<1x256xi32>
    %5 = arith.remsi %1, %4 : vector<1x256xi32>
    %c0_i32_1 = arith.constant 0 : i32
    %6 = vector.broadcast %c0_i32_1 : i32 to vector<1x256xi32>
    %7 = arith.cmpi ne, %5, %6 : vector<1x256xi32>
    %c0_i32_2 = arith.constant 0 : i32
    %8 = vector.broadcast %c0_i32_2 : i32 to vector<1x256xi32>
    %9 = arith.cmpi slt, %5, %8 : vector<1x256xi32>
    %c0_i32_3 = arith.constant 0 : i32
    %10 = arith.cmpi slt, %3, %c0_i32_3 : i32
    %11 = vector.broadcast %10 : i1 to vector<1x256xi1>
    %12 = vector.broadcast %11 : vector<1x256xi1> to vector<1x256xi1>
    %13 = arith.xori %9, %12 : vector<1x256xi1>
    %14 = arith.andi %13, %7 : vector<1x256xi1>
    %15 = vector.broadcast %3 : i32 to vector<1x256xi32>
    %16 = arith.addi %5, %15 : vector<1x256xi32>
    %17 = arith.select %14, %16, %5 : vector<1x256xi1>, vector<1x256xi32>
    %c0_i32_4 = arith.constant 0 : i32
    %18 = vector.broadcast %c0_i32_4 : i32 to vector<1x256xi32>
    %19 = arith.cmpi eq, %17, %18 : vector<1x256xi32>
    %c127_i32 = arith.constant 127 : i32
    %20 = vector.broadcast %c127_i32 : i32 to vector<1x256xi32>
    %21 = arith.cmpi eq, %17, %20 : vector<1x256xi32>
    %c0_5 = arith.constant 0 : index
    %c0_6 = arith.constant 0 : index
    %22 = vector.load %arg2[%c0_5, %c0_6] : memref<32x5xf32, #tpu.memory_space<vmem>>, vector<32x5xf32>
    %c0_7 = arith.constant 0 : index
    %c0_8 = arith.constant 0 : index
    %23 = vector.load %arg4[%c0_7, %c0_8] : memref<32x6xf32, #tpu.memory_space<vmem>>, vector<32x6xf32>
    %24 = vector.extract_strided_slice %22 {offsets = [0, 0], sizes = [32, 3], strides = [1, 1]} : vector<32x5xf32> to vector<32x3xf32>
    %c1_i32_9 = arith.constant 1 : i32
    %25 = tpu.dynamic_rotate %0 by %c1_i32_9 dim 1 : vector<32x256xf32>, i32 -> vector<32x256xf32>
    %cst = arith.constant 0.000000e+00 : f32
    %26 = vector.shape_cast %19 : vector<1x256xi1> to vector<1x256xi1>
    %27 = vector.broadcast %26 : vector<1x256xi1> to vector<32x256xi1>
    %28 = vector.broadcast %cst : f32 to vector<32x256xf32>
    %29 = arith.select %27, %28, %25 : vector<32x256xi1>, vector<32x256xf32>
    %c255_i32 = arith.constant 255 : i32
    %30 = tpu.dynamic_rotate %0 by %c255_i32 dim 1 : vector<32x256xf32>, i32 -> vector<32x256xf32>
    %cst_10 = arith.constant 0.000000e+00 : f32
    %31 = vector.shape_cast %21 : vector<1x256xi1> to vector<1x256xi1>
    %32 = vector.broadcast %31 : vector<1x256xi1> to vector<32x256xi1>
    %33 = vector.broadcast %cst_10 : f32 to vector<32x256xf32>
    %34 = arith.select %32, %33, %30 : vector<32x256xi1>, vector<32x256xf32>
    %35 = vector.extract_strided_slice %24 {offsets = [0, 0], sizes = [32, 1], strides = [1, 1]} : vector<32x3xf32> to vector<32x1xf32>
    %36 = vector.broadcast %35 : vector<32x1xf32> to vector<32x256xf32>
    %37 = arith.mulf %36, %29 : vector<32x256xf32>
    %38 = vector.extract_strided_slice %24 {offsets = [0, 1], sizes = [32, 1], strides = [1, 1]} : vector<32x3xf32> to vector<32x1xf32>
    %39 = vector.broadcast %38 : vector<32x1xf32> to vector<32x256xf32>
    %40 = arith.mulf %39, %0 : vector<32x256xf32>
    %41 = arith.addf %37, %40 : vector<32x256xf32>
    %42 = vector.extract_strided_slice %24 {offsets = [0, 2], sizes = [32, 1], strides = [1, 1]} : vector<32x3xf32> to vector<32x1xf32>
    %43 = vector.broadcast %42 : vector<32x1xf32> to vector<32x256xf32>
    %44 = arith.mulf %43, %34 : vector<32x256xf32>
    %45 = arith.addf %41, %44 : vector<32x256xf32>
    %46 = vector.extract_strided_slice %22 {offsets = [0, 3], sizes = [32, 1], strides = [1, 1]} : vector<32x5xf32> to vector<32x1xf32>
    %47 = vector.broadcast %46 : vector<32x1xf32> to vector<32x256xf32>
    %48 = arith.mulf %45, %47 : vector<32x256xf32>
    %49 = vector.extract_strided_slice %22 {offsets = [0, 4], sizes = [32, 1], strides = [1, 1]} : vector<32x5xf32> to vector<32x1xf32>
    %50 = vector.broadcast %49 : vector<32x1xf32> to vector<32x256xf32>
    %51 = arith.addf %48, %50 : vector<32x256xf32>
    %cst_11 = arith.constant 0.000000e+00 : f32
    %52 = vector.broadcast %cst_11 : f32 to vector<32x256xf32>
    %53 = arith.maximumf %51, %52 : vector<32x256xf32>
    %c0_12 = arith.constant 0 : index
    %c0_13 = arith.constant 0 : index
    %54 = vector.load %arg3[%c0_12, %c0_13] : memref<32x32xf32, #tpu.memory_space<vmem>>, vector<32x32xf32>
    %cst_14 = arith.constant dense<0.000000e+00> : vector<32x256xf32>
    %55 = tpu.matmul %54, %53, %cst_14 {dimension_numbers = #tpu.dot_dimension_numbers<[1], [0], [0], [1], [0, 0, 1, 1], [], []>} : vector<32x32xf32>, vector<32x256xf32>, vector<32x256xf32> -> vector<32x256xf32>
    %56 = vector.extract_strided_slice %23 {offsets = [0, 5], sizes = [32, 1], strides = [1, 1]} : vector<32x6xf32> to vector<32x1xf32>
    %57 = vector.broadcast %56 : vector<32x1xf32> to vector<32x256xf32>
    %58 = arith.addf %55, %57 : vector<32x256xf32>
    %cst_15 = arith.constant 0.000000e+00 : f32
    %59 = vector.broadcast %cst_15 : f32 to vector<32x256xf32>
    %60 = arith.maximumf %58, %59 : vector<32x256xf32>
    %61 = vector.extract_strided_slice %23 {offsets = [0, 0], sizes = [32, 3], strides = [1, 1]} : vector<32x6xf32> to vector<32x3xf32>
    %c1_i32_16 = arith.constant 1 : i32
    %62 = tpu.dynamic_rotate %60 by %c1_i32_16 dim 1 : vector<32x256xf32>, i32 -> vector<32x256xf32>
    %cst_17 = arith.constant 0.000000e+00 : f32
    %63 = vector.shape_cast %19 : vector<1x256xi1> to vector<1x256xi1>
    %64 = vector.broadcast %63 : vector<1x256xi1> to vector<32x256xi1>
    %65 = vector.broadcast %cst_17 : f32 to vector<32x256xf32>
    %66 = arith.select %64, %65, %62 : vector<32x256xi1>, vector<32x256xf32>
    %c255_i32_18 = arith.constant 255 : i32
    %67 = tpu.dynamic_rotate %60 by %c255_i32_18 dim 1 : vector<32x256xf32>, i32 -> vector<32x256xf32>
    %cst_19 = arith.constant 0.000000e+00 : f32
    %68 = vector.shape_cast %21 : vector<1x256xi1> to vector<1x256xi1>
    %69 = vector.broadcast %68 : vector<1x256xi1> to vector<32x256xi1>
    %70 = vector.broadcast %cst_19 : f32 to vector<32x256xf32>
    %71 = arith.select %69, %70, %67 : vector<32x256xi1>, vector<32x256xf32>
    %72 = vector.extract_strided_slice %61 {offsets = [0, 0], sizes = [32, 1], strides = [1, 1]} : vector<32x3xf32> to vector<32x1xf32>
    %73 = vector.broadcast %72 : vector<32x1xf32> to vector<32x256xf32>
    %74 = arith.mulf %73, %66 : vector<32x256xf32>
    %75 = vector.extract_strided_slice %61 {offsets = [0, 1], sizes = [32, 1], strides = [1, 1]} : vector<32x3xf32> to vector<32x1xf32>
    %76 = vector.broadcast %75 : vector<32x1xf32> to vector<32x256xf32>
    %77 = arith.mulf %76, %60 : vector<32x256xf32>
    %78 = arith.addf %74, %77 : vector<32x256xf32>
    %79 = vector.extract_strided_slice %61 {offsets = [0, 2], sizes = [32, 1], strides = [1, 1]} : vector<32x3xf32> to vector<32x1xf32>
    %80 = vector.broadcast %79 : vector<32x1xf32> to vector<32x256xf32>
    %81 = arith.mulf %80, %71 : vector<32x256xf32>
    %82 = arith.addf %78, %81 : vector<32x256xf32>
    %83 = vector.extract_strided_slice %23 {offsets = [0, 3], sizes = [32, 1], strides = [1, 1]} : vector<32x6xf32> to vector<32x1xf32>
    %84 = vector.broadcast %83 : vector<32x1xf32> to vector<32x256xf32>
    %85 = arith.mulf %82, %84 : vector<32x256xf32>
    %86 = vector.extract_strided_slice %23 {offsets = [0, 4], sizes = [32, 1], strides = [1, 1]} : vector<32x6xf32> to vector<32x1xf32>
    %87 = vector.broadcast %86 : vector<32x1xf32> to vector<32x256xf32>
    %88 = arith.addf %85, %87 : vector<32x256xf32>
    %89 = arith.addf %88, %0 : vector<32x256xf32>
    %c0_20 = arith.constant 0 : index
    %c0_21 = arith.constant 0 : index
    %90 = vector.load %arg5[%c0_20, %c0_21] : memref<32x256xf32, #tpu.memory_space<vmem>>, vector<32x256xf32>
    tpu.vector_store %arg5[%c0_20, %c0_21], %89 {strides = array<i32>} : memref<32x256xf32, #tpu.memory_space<vmem>>, vector<32x256xf32>,
    return
  }
  func.func @transform_0(%arg0: i32) -> (i32, i32) {
    %c0_i32 = arith.constant 0 : i32
    %c0_i32_0 = arith.constant 0 : i32
    return %c0_i32, %arg0 : i32, i32
  }
  func.func @transform_1(%arg0: i32) -> (i32, i32) {
    %c0_i32 = arith.constant 0 : i32
    %c0_i32_0 = arith.constant 0 : i32
    %c0_i32_1 = arith.constant 0 : i32
    return %c0_i32, %c0_i32_0 : i32, i32
  }
  func.func @transform_2(%arg0: i32) -> (i32, i32) {
    %c0_i32 = arith.constant 0 : i32
    %c0_i32_0 = arith.constant 0 : i32
    %c0_i32_1 = arith.constant 0 : i32
    return %c0_i32, %c0_i32_0 : i32, i32
  }
  func.func @transform_3(%arg0: i32) -> (i32, i32) {
    %c0_i32 = arith.constant 0 : i32
    %c0_i32_0 = arith.constant 0 : i32
    %c0_i32_1 = arith.constant 0 : i32
    return %c0_i32, %c0_i32_0 : i32, i32
  }
  func.func @transform_4(%arg0: i32) -> (i32, i32) {
    %c0_i32 = arith.constant 0 : i32
    %c0_i32_0 = arith.constant 0 : i32
    return %c0_i32, %arg0 : i32, i32
  }
}

</mosaic_0001>

<llo_original>
// kernel: tpu_custom_call.1
$region0: #{tpu_custom_call.1}
  #allocation0 [shape = 'u32[]', space=smem, size = 0x4, offset = 0x4, fixed_abs, tag = 'smem constant byte address 0x4 - core index']
  #allocation1 [shape = 'u32[144,128]{1,0:T(1,128)}', space=vmem, size = 0x12000, scoped, tag = 'internal scratch']
  %s0 = inlined_call_operand.hbm [shape: f32[32,512], index: 0, kind: input, shape index: {}]
  %s1 = inlined_call_operand.vmem [shape: f32[32,5], index: 1, kind: input, shape index: {}]
  %s2 = inlined_call_operand.vmem [shape: f32[32,32], index: 2, kind: input, shape index: {}]
  %s3 = inlined_call_operand.vmem [shape: f32[32,6], index: 3, kind: input, shape index: {}]
  %s4 = inlined_call_operand.hbm [shape: f32[32,512], index: 4, kind: output, shape index: {}]
  %s5 = sld [smem:[#allocation0]]
  $region53: #{tpu_custom_call.1} parent=0
    _
  %s7 = ssub.s32 1, %s5
  %s8 = scalar_select 0, %s7, %s5
  $region1: #{tpu_custom_call.1} parent=0
    #allocation2 [shape = 'u8[65536]{0}', space=vmem, size = 0x10000, scoped, tag = 'input window, operand 0']
    #allocation3 [shape = 's32[2]{0}', space=sflag, size = 0x8, scoped, tag = 'scoped memory for tpu_custom_call.1']
    #allocation4 [shape = 's32[2]{0}', space=sflag, size = 0x8, scoped, tag = 'scoped memory for tpu_custom_call.1']
    #allocation5 [shape = 'u8[65536]{0}', space=vmem, size = 0x10000, scoped, tag = 'output window, operand 0']
    %9 = vsyncpa [#allocation3], 0
    %s10 = scalar_lea.sflag [#allocation3], 1
    %11 = vsyncpa %s10, 0
    %12 = vsyncpa [#allocation4], 0
    %s13 = scalar_lea.sflag [#allocation4], 1
    %14 = vsyncpa %s13, 0
    loop: start=0, step=1, limit=4
    $region2: #{tpu_custom_call.1} parent=1 // loop_pre_header
      _
    $region3: #{tpu_custom_call.1} parent=1 // loop_header
      %s16 = sphi 0, %s20
      %p17 = scmp.ge.s32.totalorder %s16, 4
      %s26 = sphi 0, %s28
      %s29 = sphi 0, %s26
      %s30 = sphi 0, %s29
      %s46 = sphi 0, %s30
      %s50 = sphi 0, %s50
      %s52 = sphi 0, %s50
      %s53 = sphi 0, %s52
      %s67 = sphi 0, %s53
      %s71 = sphi 0, %s71
      %s73 = sphi 0, %s71
      %s74 = sphi 0, %s73
      %s88 = sphi 0, %s74
      %s92 = sphi 0, %s92
      %s94 = sphi 0, %s92
      %s95 = sphi 0, %s94
      %s109 = sphi 0, %s95
      %s115 = sphi 0, %s117
      %s118 = sphi 0, %s115
      %s119 = sphi 0, %s118
      %s135 = sphi 0, %s119
    $region4: #{tpu_custom_call.1} parent=1 // loop_header_branch
      %19 = sbr.rel (%p17) target = $region8
    $region5: #{tpu_custom_call.1} parent=1 // loop_body
      %s21 = ssub.s32 %s16, 1
      %s22 = ssub.s32 %s16, 2
      %s23 = sadd.s32 %s16, 1
      %s24 = ssub.s32 %s16, %s23
      %p25 = scmp.eq.s32.totalorder %s24, 0
      %s27 = sadd.s32 %s26, 1
      %s28 = scalar_select %p25, %s26, %s27
      %p31 = pneg %p25
      %p32 = scmp.eq.s32.totalorder %s16, 1
      %p33 = por %p31, %p32
      %p34 = scmp.ne.s32.totalorder %s26, %s29
      %p35 = scmp.eq.s32.totalorder %s16, 0
      %p36 = por %p34, %p35
      %p37 = scmp.ne.s32.totalorder %s26, %s29
      %p38 = scmp.eq.s32.totalorder %s21, 1
      %p39 = por %p37, %p38
      %p40 = scmp.ne.s32.totalorder %s29, %s30
      %p41 = scmp.eq.s32.totalorder %s21, 0
      %p42 = por %p40, %p41
      %p43 = scmp.ne.s32.totalorder %s29, %s30
      %p44 = scmp.eq.s32.totalorder %s22, 1
      %p45 = por %p43, %p44
      %p47 = scmp.ne.s32.totalorder %s30, %s46
      %p48 = scmp.eq.s32.totalorder %s22, 0
      %p49 = por %p47, %p48
      %s51 = sadd.s32 %s50, 1
      %p54 = scmp.eq.s32.totalorder %s16, 1
      %p55 = scmp.ne.s32.totalorder %s50, %s52
      %p56 = scmp.eq.s32.totalorder %s16, 0
      %p57 = por %p55, %p56
      %p58 = scmp.ne.s32.totalorder %s50, %s52
      %p59 = scmp.eq.s32.totalorder %s21, 1
      %p60 = por %p58, %p59
      %p61 = scmp.ne.s32.totalorder %s52, %s53
      %p62 = scmp.eq.s32.totalorder %s21, 0
      %p63 = por %p61, %p62
      %p64 = scmp.ne.s32.totalorder %s52, %s53
      %p65 = scmp.eq.s32.totalorder %s22, 1
      %p66 = por %p64, %p65
      %p68 = scmp.ne.s32.totalorder %s53, %s67
      %p69 = scmp.eq.s32.totalorder %s22, 0
      %p70 = por %p68, %p69
      %s72 = sadd.s32 %s71, 1
      %p75 = scmp.eq.s32.totalorder %s16, 1
      %p76 = scmp.ne.s32.totalorder %s71, %s73
      %p77 = scmp.eq.s32.totalorder %s16, 0
      %p78 = por %p76, %p77
      %p79 = scmp.ne.s32.totalorder %s71, %s73
      %p80 = scmp.eq.s32.totalorder %s21, 1
      %p81 = por %p79, %p80
      %p82 = scmp.ne.s32.totalorder %s73, %s74
      %p83 = scmp.eq.s32.totalorder %s21, 0
      %p84 = por %p82, %p83
      %p85 = scmp.ne.s32.totalorder %s73, %s74
      %p86 = scmp.eq.s32.totalorder %s22, 1
      %p87 = por %p85, %p86
      %p89 = scmp.ne.s32.totalorder %s74, %s88
      %p90 = scmp.eq.s32.totalorder %s22, 0
      %p91 = por %p89, %p90
      %s93 = sadd.s32 %s92, 1
      %p96 = scmp.eq.s32.totalorder %s16, 1
      %p97 = scmp.ne.s32.totalorder %s92, %s94
      %p98 = scmp.eq.s32.totalorder %s16, 0
      %p99 = por %p97, %p98
      %p100 = scmp.ne.s32.totalorder %s92, %s94
      %p101 = scmp.eq.s32.totalorder %s21, 1
      %p102 = por %p100, %p101
      %p103 = scmp.ne.s32.totalorder %s94, %s95
      %p104 = scmp.eq.s32.totalorder %s21, 0
      %p105 = por %p103, %p104
      %p106 = scmp.ne.s32.totalorder %s94, %s95
      %p107 = scmp.eq.s32.totalorder %s22, 1
      %p108 = por %p106, %p107
      %p110 = scmp.ne.s32.totalorder %s95, %s109
      %p111 = scmp.eq.s32.totalorder %s22, 0
      %p112 = por %p110, %p111
      %s113 = ssub.s32 %s16, %s23
      %p114 = scmp.eq.s32.totalorder %s113, 0
      %s116 = sadd.s32 %s115, 1
      %s117 = scalar_select %p114, %s115, %s116
      %p120 = pneg %p114
      %p121 = scmp.eq.s32.totalorder %s16, 1
      %p122 = por %p120, %p121
      %p123 = scmp.ne.s32.totalorder %s115, %s118
      %p124 = scmp.eq.s32.totalorder %s16, 0
      %p125 = por %p123, %p124
      %p126 = scmp.ne.s32.totalorder %s115, %s118
      %p127 = scmp.eq.s32.totalorder %s21, 1
      %p128 = por %p126, %p127
      %p129 = scmp.ne.s32.totalorder %s118, %s119
      %p130 = scmp.eq.s32.totalorder %s21, 0
      %p131 = por %p129, %p130
      %p132 = scmp.ne.s32.totalorder %s118, %s119
      %p133 = scmp.eq.s32.totalorder %s22, 1
      %p134 = por %p132, %p133
      %p136 = scmp.ne.s32.totalorder %s119, %s135
      %p137 = scmp.eq.s32.totalorder %s22, 0
      %p138 = por %p136, %p137
      %p139 = scmp.le.s32.totalorder 1, %s16
      %p140 = scmp.lt.s32.totalorder %s16, 3
      %p141 = pnand %p139, %p140
      %p142 = pneg %p141
      // Predicated region
      $region9: #{tpu_custom_call.1} parent=5 // pred_check
        _
      $region10: #{tpu_custom_call.1} parent=5 // pred_check_branch
        %144 = sbr.rel (%p141) target = $region12
      $region11: #{tpu_custom_call.1} parent=5 // pred_region
        %s145 = ssub.s32 %s16, 1
        // Predicated region
        $region13: #{tpu_custom_call.1} parent=11 // pred_check
          %p146 = pneg %p63
        $region14: #{tpu_custom_call.1} parent=11 // pred_check_branch
          %148 = sbr.rel (%p146) target = $region16
        $region15: #{tpu_custom_call.1} parent=11 // pred_region
          _
        $region16: #{tpu_custom_call.1} parent=11 // pred_fallthru
          _
        // Predicated region
        $region17: #{tpu_custom_call.1} parent=11 // pred_check
          %p149 = pneg %p84
        $region18: #{tpu_custom_call.1} parent=11 // pred_check_branch
          %151 = sbr.rel (%p149) target = $region20
        $region19: #{tpu_custom_call.1} parent=11 // pred_region
          _
        $region20: #{tpu_custom_call.1} parent=11 // pred_fallthru
          _
        // Predicated region
        $region21: #{tpu_custom_call.1} parent=11 // pred_check
          %p152 = pneg %p105
        $region22: #{tpu_custom_call.1} parent=11 // pred_check_branch
          %154 = sbr.rel (%p152) target = $region24
        $region23: #{tpu_custom_call.1} parent=11 // pred_region
          _
        $region24: #{tpu_custom_call.1} parent=11 // pred_fallthru
          _
      $region12: #{tpu_custom_call.1} parent=5 // pred_fallthru
        _
      %p155 = scmp.lt.s32.totalorder %s16, 2
      // Predicated region
      $region25: #{tpu_custom_call.1} parent=5 // pred_check
        %p156 = pneg %p155
      $region26: #{tpu_custom_call.1} parent=5 // pred_check_branch
        %158 = sbr.rel (%p156) target = $region28
      $region27: #{tpu_custom_call.1} parent=5 // pred_region
        // Predicated region
        $region29: #{tpu_custom_call.1} parent=27 // pred_check
          %p159 = pneg %p36
        $region30: #{tpu_custom_call.1} parent=27 // pred_check_branch
          %161 = sbr.rel (%p159) target = $region32
        $region31: #{tpu_custom_call.1} parent=27 // pred_region
          %s162 = sand.u32 %s26, 1
          %s163 = scalar_lea.sflag [#allocation3], %s162
          %s164 = sand.u32 %s26, 1
          %s165 = smul.addr %s164, 64
          %s166 = scalar_lea.vmem [#allocation2], %s165
          %s167 = smul.u32 2, %s16
          %s169 = ssub.s32 1024, 1024
          %170 = vsyncadd %s163, %s169
          %s171 = smul.addr %s167, 128
          %s172 = scalar_lea.hbm %s0, %s171
          %s173 = sshll.u32 %s166, 4
          %s174 = int_to_ptr.vmem [resolvable:$true] %s173
          %179 = dma.hbm_to_vmem [thread:$0]  %s172, 1024, %s174, %s163, 512, 256, 16
        $region32: #{tpu_custom_call.1} parent=27 // pred_fallthru
          _
      $region28: #{tpu_custom_call.1} parent=5 // pred_fallthru
        _
      %p180 = scmp.le.s32.totalorder 1, %s16
      %p181 = scmp.lt.s32.totalorder %s16, 3
      %p182 = pnand %p180, %p181
      %p183 = pneg %p182
      // Predicated region
      $region33: #{tpu_custom_call.1} parent=5 // pred_check
        _
      $region34: #{tpu_custom_call.1} parent=5 // pred_check_branch
        %185 = sbr.rel (%p182) target = $region36
      $region35: #{tpu_custom_call.1} parent=5 // pred_region
        %s186 = ssub.s32 %s16, 1
        %s187 = sand.u32 %s29, 1
        %s188 = scalar_lea.sflag [#allocation3], %s187
        %s189 = sand.u32 %s29, 1
        %s190 = smul.addr %s189, 64
        %s191 = scalar_lea.vmem [#allocation2], %s190
        // Predicated region
        $region37: #{tpu_custom_call.1} parent=35 // pred_check
          %p192 = pneg %p42
        $region38: #{tpu_custom_call.1} parent=35 // pred_check_branch
          %194 = sbr.rel (%p192) target = $region40
        $region39: #{tpu_custom_call.1} parent=35 // pred_region
          %195 = dma.done %s188, 1024
        $region40: #{tpu_custom_call.1} parent=35 // pred_fallthru
          _
        %s196 = sand.u32 %s29, 1
        %s197 = scalar_lea.sflag [#allocation3], %s196
        %s198 = sand.u32 %s29, 1
        %s199 = smul.addr %s198, 64
        %s200 = scalar_lea.vmem [#allocation2], %s199
        %p201 = pneg %p42
        %p202 = pneg %p39
        %p203 = pneg %p63
        %p204 = pneg %p60
        %p205 = pneg %p84
        %p206 = pneg %p81
        %p207 = pneg %p105
        %p208 = pneg %p102
        %p209 = pneg %p131
        %p210 = pneg %p128
        %s211 = sand.u32 %s118, 1
        %s212 = scalar_lea.sflag [#allocation4], %s211
        %s213 = sand.u32 %s118, 1
        %s214 = smul.addr %s213, 64
        %s215 = scalar_lea.vmem [#allocation5], %s214
        %s216 = smul.u32 2, %s21
        %s217 = smul.u32 2, %s21
        %v218 = vld [vmem:[%s191] sm:$0xff]
        %v219 = vld [vmem:[%s191 + $0x8] sm:$0xff]
        %v220 = vld [vmem:[%s191 + $0x10] sm:$0xff]
        %v221 = vld [vmem:[%s191 + $0x18] sm:$0xff]
        %v222 = vld [vmem:[%s191 + $0x20] sm:$0xff]
        %v223 = vld [vmem:[%s191 + $0x28] sm:$0xff]
        %v224 = vld [vmem:[%s191 + $0x30] sm:$0xff]
        %v225 = vld [vmem:[%s191 + $0x38] sm:$0xff]
        %v226 = vlaneseq
        %v227 = vand.u32 %v226, 127
        %v228 = vadd.s32 %v227, 128
        %vm229 = vcmp.lt.s32.totalorder %v227, 0
        %v230 = vsub.s32 0, %v227
        %v231 = vsel %vm229, %v230, %v227
        %v232 = vshrl.u32 %v231, 7
        %v233 = vand.u32 %v231, 127
        %v234 = vsub.s32 0, %v233
        %v235 = vsel %vm229, %v234, %v233
        %vm236 = vcmp.lt.s32.totalorder %v228, 0
        %v237 = vsub.s32 0, %v228
        %v238 = vsel %vm236, %v237, %v228
        %v239 = vshrl.u32 %v238, 7
        %v240 = vand.u32 %v238, 127
        %v241 = vsub.s32 0, %v240
        %v242 = vsel %vm236, %v241, %v240
        %vm243 = vcmp.ne.s32.totalorder %v235, 0
        %vm244 = vcmp.ne.s32.totalorder %v242, 0
        %vm245 = vcmp.lt.s32.totalorder %v235, 0
        %vm246 = vcmp.lt.s32.totalorder %v242, 0
        %vm247 = vmand %vm245, %vm243
        %vm248 = vmand %vm246, %vm244
        %v249 = vadd.s32 %v235, 128
        %v250 = vadd.s32 %v242, 128
        %v251 = vsel %vm247, %v249, %v235
        %v252 = vsel %vm248, %v250, %v242
        %vm253 = vcmp.eq.s32.totalorder %v251, 0
        %vm254 = vcmp.eq.s32.totalorder %v252, 0
        %vm255 = vcmp.eq.s32.totalorder %v251, 127
        %vm256 = vcmp.eq.s32.totalorder %v252, 127
        %v257 = vld [vmem:[%s1] sm:$0xff]
        %v258 = vld [vmem:[%s1 + $0x8] sm:$0xff]
        %v259 = vld [vmem:[%s1 + $0x10] sm:$0xff]
        %v260 = vld [vmem:[%s1 + $0x18] sm:$0xff]
        %v261 = vld [vmem:[%s3] sm:$0xff]
        %v262 = vld [vmem:[%s3 + $0x8] sm:$0xff]
        %v263 = vld [vmem:[%s3 + $0x10] sm:$0xff]
        %v264 = vld [vmem:[%s3 + $0x18] sm:$0xff]
        %265 = vrot.lane.b32.xlu0 %v218, 1
        %v266 = vpop.permute.xlu0 %265
        %267 = vrot.lane.b32.xlu0 %v220, 1
        %v268 = vpop.permute.xlu0 %267
        %269 = vrot.lane.b32.xlu0 %v222, 1
        %v270 = vpop.permute.xlu0 %269
        %271 = vrot.lane.b32.xlu0 %v224, 1
        %v272 = vpop.permute.xlu0 %271
        %273 = vrot.lane.b32.xlu0 %v219, 1
        %v274 = vpop.permute.xlu0 %273
        %275 = vrot.lane.b32.xlu0 %v221, 1
        %v276 = vpop.permute.xlu0 %275
        %277 = vrot.lane.b32.xlu0 %v223, 1
        %v278 = vpop.permute.xlu0 %277
        %279 = vrot.lane.b32.xlu0 %v225, 1
        %v280 = vpop.permute.xlu0 %279
        %vm281 = vcmp.lt.s32.totalorder %v227, 1
        %v282 = vsel %vm281, %v266, %v274
        %v283 = vsel %vm281, %v268, %v276
        %v284 = vsel %vm281, %v270, %v278
        %v285 = vsel %vm281, %v272, %v280
        %v286 = vsel %vm281, %v274, %v266
        %v287 = vsel %vm281, %v276, %v268
        %v288 = vsel %vm281, %v278, %v270
        %v289 = vsel %vm281, %v280, %v272
        %v290 = vsel %vm253, 1, 0
        %v291 = vsel %vm254, 1, 0
        %vm292 = vcmp.eq.s32.totalorder %v290, 1
        %vm293 = vcmp.eq.s32.totalorder %v291, 1
        %v294 = vsel %vm292, 0.0, %v286
        %v295 = vsel %vm293, 0.0, %v282
        %v296 = vsel %vm292, 0.0, %v287
        %v297 = vsel %vm293, 0.0, %v283
        %v298 = vsel %vm292, 0.0, %v288
        %v299 = vsel %vm293, 0.0, %v284
        %v300 = vsel %vm292, 0.0, %v289
        %v301 = vsel %vm293, 0.0, %v285
        %302 = vrot.lane.b32.xlu0 %v218, 127
        %v303 = vpop.permute.xlu0 %302
        %304 = vrot.lane.b32.xlu0 %v220, 127
        %v305 = vpop.permute.xlu0 %304
        %306 = vrot.lane.b32.xlu0 %v222, 127
        %v307 = vpop.permute.xlu0 %306
        %308 = vrot.lane.b32.xlu0 %v224, 127
        %v309 = vpop.permute.xlu0 %308
        %310 = vrot.lane.b32.xlu0 %v219, 127
        %v311 = vpop.permute.xlu0 %310
        %312 = vrot.lane.b32.xlu0 %v221, 127
        %v313 = vpop.permute.xlu0 %312
        %314 = vrot.lane.b32.xlu0 %v223, 127
        %v315 = vpop.permute.xlu0 %314
        %316 = vrot.lane.b32.xlu0 %v225, 127
        %v317 = vpop.permute.xlu0 %316
        %vm318 = vcmp.lt.s32.totalorder %v227, 127
        %v319 = vsel %vm318, %v303, %v311
        %v320 = vsel %vm318, %v305, %v313
        %v321 = vsel %vm318, %v307, %v315
        %v322 = vsel %vm318, %v309, %v317
        %v323 = vsel %vm318, %v311, %v303
        %v324 = vsel %vm318, %v313, %v305
        %v325 = vsel %vm318, %v315, %v307
        %v326 = vsel %vm318, %v317, %v309
        %v327 = vsel %vm255, 1, 0
        %v328 = vsel %vm256, 1, 0
        %vm329 = vcmp.eq.s32.totalorder %v327, 1
        %vm330 = vcmp.eq.s32.totalorder %v328, 1
        %v331 = vsel %vm329, 0.0, %v319
        %v332 = vsel %vm330, 0.0, %v323
        %v333 = vsel %vm329, 0.0, %v320
        %v334 = vsel %vm330, 0.0, %v324
        %v335 = vsel %vm329, 0.0, %v321
        %v336 = vsel %vm330, 0.0, %v325
        %v337 = vsel %vm329, 0.0, %v322
        %v338 = vsel %vm330, 0.0, %v326
        %340 = vset.pattern.permute.xlu0 0
        %341 = vperm.xlu0 %340, %v257
        %v342 = vpop.permute.xlu0 %341
        %345 = vset.pattern.permute.xlu0 0
        %346 = vperm.xlu0 %345, %v258
        %v347 = vpop.permute.xlu0 %346
        %350 = vset.pattern.permute.xlu0 0
        %351 = vperm.xlu0 %350, %v259
        %v352 = vpop.permute.xlu0 %351
        %355 = vset.pattern.permute.xlu0 0
        %356 = vperm.xlu0 %355, %v260
        %v357 = vpop.permute.xlu0 %356
        %v359 = vmul.f32 %v342, %v294
        %v360 = vmul.f32 %v342, %v295
        %v361 = vmul.f32 %v347, %v296
        %v362 = vmul.f32 %v347, %v297
        %v363 = vmul.f32 %v352, %v298
        %v364 = vmul.f32 %v352, %v299
        %v365 = vmul.f32 %v357, %v300
        %v366 = vmul.f32 %v357, %v301
        %367 = vset.pattern.permute.xlu0 1
        %368 = vperm.xlu0 %367, %v257
        %v369 = vpop.permute.xlu0 %368
        %371 = vset.pattern.permute.xlu0 1
        %372 = vperm.xlu0 %371, %v258
        %v373 = vpop.permute.xlu0 %372
        %375 = vset.pattern.permute.xlu0 1
        %376 = vperm.xlu0 %375, %v259
        %v377 = vpop.permute.xlu0 %376
        %379 = vset.pattern.permute.xlu0 1
        %380 = vperm.xlu0 %379, %v260
        %v381 = vpop.permute.xlu0 %380
        %v383 = vmul.f32 %v369, %v218
        %v384 = vmul.f32 %v369, %v219
        %v385 = vmul.f32 %v373, %v220
        %v386 = vmul.f32 %v373, %v221
        %v387 = vmul.f32 %v377, %v222
        %v388 = vmul.f32 %v377, %v223
        %v389 = vmul.f32 %v381, %v224
        %v390 = vmul.f32 %v381, %v225
        %v391 = vadd.f32 %v359, %v383
        %v392 = vadd.f32 %v360, %v384
        %v393 = vadd.f32 %v361, %v385
        %v394 = vadd.f32 %v362, %v386
        %v395 = vadd.f32 %v363, %v387
        %v396 = vadd.f32 %v364, %v388
        %v397 = vadd.f32 %v365, %v389
        %v398 = vadd.f32 %v366, %v390
        %399 = vset.pattern.permute.xlu0 2
        %400 = vperm.xlu0 %399, %v257
        %v401 = vpop.permute.xlu0 %400
        %403 = vset.pattern.permute.xlu0 2
        %404 = vperm.xlu0 %403, %v258
        %v405 = vpop.permute.xlu0 %404
        %407 = vset.pattern.permute.xlu0 2
        %408 = vperm.xlu0 %407, %v259
        %v409 = vpop.permute.xlu0 %408
        %411 = vset.pattern.permute.xlu0 2
        %412 = vperm.xlu0 %411, %v260
        %v413 = vpop.permute.xlu0 %412
        %v415 = vmul.f32 %v401, %v331
        %v416 = vmul.f32 %v401, %v332
        %v417 = vmul.f32 %v405, %v333
        %v418 = vmul.f32 %v405, %v334
        %v419 = vmul.f32 %v409, %v335
        %v420 = vmul.f32 %v409, %v336
        %v421 = vmul.f32 %v413, %v337
        %v422 = vmul.f32 %v413, %v338
        %v423 = vadd.f32 %v391, %v415
        %v424 = vadd.f32 %v392, %v416
        %v425 = vadd.f32 %v393, %v417
        %v426 = vadd.f32 %v394, %v418
        %v427 = vadd.f32 %v395, %v419
        %v428 = vadd.f32 %v396, %v420
        %v429 = vadd.f32 %v397, %v421
        %v430 = vadd.f32 %v398, %v422
        %431 = vset.pattern.permute.xlu0 3
        %432 = vperm.xlu0 %431, %v257
        %v433 = vpop.permute.xlu0 %432
        %435 = vset.pattern.permute.xlu0 3
        %436 = vperm.xlu0 %435, %v258
        %v437 = vpop.permute.xlu0 %436
        %439 = vset.pattern.permute.xlu0 3
        %440 = vperm.xlu0 %439, %v259
        %v441 = vpop.permute.xlu0 %440
        %443 = vset.pattern.permute.xlu0 3
        %444 = vperm.xlu0 %443, %v260
        %v445 = vpop.permute.xlu0 %444
        %v447 = vmul.f32 %v423, %v433
        %v448 = vmul.f32 %v424, %v433
        %v449 = vmul.f32 %v425, %v437
        %v450 = vmul.f32 %v426, %v437
        %v451 = vmul.f32 %v427, %v441
        %v452 = vmul.f32 %v428, %v441
        %v453 = vmul.f32 %v429, %v445
        %v454 = vmul.f32 %v430, %v445
        %455 = vset.pattern.permute.xlu0 4
        %456 = vperm.xlu0 %455, %v257
        %v457 = vpop.permute.xlu0 %456
        %459 = vset.pattern.permute.xlu0 4
        %460 = vperm.xlu0 %459, %v258
        %v461 = vpop.permute.xlu0 %460
        %463 = vset.pattern.permute.xlu0 4
        %464 = vperm.xlu0 %463, %v259
        %v465 = vpop.permute.xlu0 %464
        %467 = vset.pattern.permute.xlu0 4
        %468 = vperm.xlu0 %467, %v260
        %v469 = vpop.permute.xlu0 %468
        %v471 = vadd.f32 %v447, %v457
        %v472 = vadd.f32 %v448, %v457
        %v473 = vadd.f32 %v449, %v461
        %v474 = vadd.f32 %v450, %v461
        %v475 = vadd.f32 %v451, %v465
        %v476 = vadd.f32 %v452, %v465
        %v477 = vadd.f32 %v453, %v469
        %v478 = vadd.f32 %v454, %v469
        %v479 = vmax.f32 %v471, 0.0
        %v480 = vmax.f32 %v472, 0.0
        %v481 = vmax.f32 %v473, 0.0
        %v482 = vmax.f32 %v474, 0.0
        %v483 = vmax.f32 %v475, 0.0
        %v484 = vmax.f32 %v476, 0.0
        %v485 = vmax.f32 %v477, 0.0
        %v486 = vmax.f32 %v478, 0.0
        %v487 = vld [vmem:[%s2] sm:$0xff]
        %v488 = vld [vmem:[%s2 + $0x8] sm:$0xff]
        %v489 = vld [vmem:[%s2 + $0x10] sm:$0xff]
        %v490 = vld [vmem:[%s2 + $0x18] sm:$0xff]
        %492 = vset.pattern.permute.xlu0 5
        %493 = vperm.xlu0 %492, %v261
        %v494 = vpop.permute.xlu0 %493
        %497 = vset.pattern.permute.xlu0 5
        %498 = vperm.xlu0 %497, %v262
        %v499 = vpop.permute.xlu0 %498
        %502 = vset.pattern.permute.xlu0 5
        %503 = vperm.xlu0 %502, %v263
        %v504 = vpop.permute.xlu0 %503
        %507 = vset.pattern.permute.xlu0 5
        %508 = vperm.xlu0 %507, %v264
        %v509 = vpop.permute.xlu0 %508
        %vm511 = vcmask 261120
        %v513 = vsel %vm511, %v487, 0
        %v516 = vsel %vm511, %v488, 0
        %v519 = vsel %vm511, %v489, 0
        %v522 = vsel %vm511, %v490, 0
        %524 = vmatprep.subr.mxu0 %v480
        %525 = vmatpush1.msra.mxu0 %v479
        %526 = vmatprep.subr.mxu0 %v482
        %527 = vmatpush1.msra.mxu0 %v481
        %528 = vmatprep.subr.mxu0 %v484
        %529 = vmatpush1.msra.mxu0 %v483
        %530 = vmatprep.subr.mxu0 %v486
        %531 = vmatpush1.msra.mxu0 %v485
        %532 = vmatprep.subr.mxu0 0.0
        %533 = vmatpush1.msra.mxu0 0.0
        %534 = vmatprep.subr.mxu0 0.0
        %535 = vmatpush1.msra.mxu0 0.0
        %536 = vmatprep.subr.mxu0 0.0
        %537 = vmatpush1.msra.mxu0 0.0
        %538 = vmatprep.subr.mxu0 0.0
        %539 = vmatpush1.msra.mxu0 0.0
        %540 = vmatprep.subr.mxu0 0.0
        %541 = vmatpush1.msra.mxu0 0.0
        %542 = vmatprep.subr.mxu0 0.0
        %543 = vmatpush1.msra.mxu0 0.0
        %544 = vmatprep.subr.mxu0 0.0
        %545 = vmatpush1.msra.mxu0 0.0
        %546 = vmatprep.subr.mxu0 0.0
        %547 = vmatpush1.msra.mxu0 0.0
        %548 = vmatprep.subr.mxu0 0.0
        %549 = vmatpush1.msra.mxu0 0.0
        %550 = vmatprep.subr.mxu0 0.0
        %551 = vmatpush1.msra.mxu0 0.0
        %552 = vmatprep.subr.mxu0 0.0
        %553 = vmatpush1.msra.mxu0 0.0
        %554 = vmatprep.subr.mxu0 0.0
        %555 = vmatpush1.msra.mxu0 0.0
        %556 = vmatprep.subr.mxu0 0.0
        %557 = vmatpush1.msra.mxu0 0.0
        %558 = vmatprep.subr.mxu0 0.0
        %559 = vmatpush1.msra.mxu0 0.0
        %560 = vmatprep.subr.mxu0 0.0
        %561 = vmatpush1.msra.mxu0 0.0
        %562 = vmatprep.subr.mxu0 0.0
        %563 = vmatpush1.msra.mxu0 0.0
        %564 = vmatprep.subr.mxu0 0.0
        %565 = vmatpush1.msra.mxu0 0.0
        %566 = vmatprep.subr.mxu0 0.0
        %567 = vmatpush1.msra.mxu0 0.0
        %568 = vmatprep.subr.mxu0 0.0
        %569 = vmatpush1.msra.mxu0 0.0
        %570 = vmatprep.subr.mxu0 0.0
        %571 = vmatpush1.msra.mxu0 0.0
        %572 = vmatprep.subr.mxu0 0.0
        %573 = vmatpush1.msra.mxu0 0.0
        %574 = vmatprep.subr.mxu0 0.0
        %575 = vmatpush1.msra.mxu0 0.0
        %576 = vmatprep.subr.mxu0 0.0
        %577 = vmatpush1.msra.mxu0 0.0
        %578 = vmatprep.subr.mxu0 0.0
        %579 = vmatpush1.msra.mxu0 0.0
        %580 = vmatprep.subr.mxu0 0.0
        %581 = vmatpush1.msra.mxu0 0.0
        %582 = vmatprep.subr.mxu0 0.0
        %583 = vmatpush1.msra.mxu0 0.0
        %584 = vmatprep.subr.mxu0 0.0
        %585 = vmatpush1.msra.mxu0 0.0
        %586 = vmatprep.subr.mxu0 0.0
        %587 = vmatpush1.msra.mxu0 0.0
        %588 = vmatprep.mubr.f32.mxu0 0.0
        %589 = vmatmul.mubr.f32.gmra.mrb[0].mxu0 %v513
        %v590 = vpop.f32.mrb[0].mxu0
        %v591 = vadd.f32 %v494, %v590
        %v592 = vpop.f32.mrb[0].mxu0
        %v593 = vadd.f32 %v494, %v592
        %594 = vmatprep.mubr.f32.mxu0 0.0
        %595 = vmatmul.mubr.f32.gmra.mrb[0].mxu0 %v516
        %v596 = vpop.f32.mrb[0].mxu0
        %v597 = vadd.f32 %v499, %v596
        %v598 = vpop.f32.mrb[0].mxu0
        %v599 = vadd.f32 %v499, %v598
        %600 = vmatprep.mubr.f32.mxu0 0.0
        %601 = vmatmul.mubr.f32.gmra.mrb[0].mxu0 %v519
        %v602 = vpop.f32.mrb[0].mxu0
        %v603 = vadd.f32 %v504, %v602
        %v604 = vpop.f32.mrb[0].mxu0
        %v605 = vadd.f32 %v504, %v604
        %606 = vmatprep.mubr.f32.mxu0 0.0
        %607 = vmatmul.mubr.f32.gmra.mrb[0].mxu0 %v522
        %v608 = vpop.f32.mrb[0].mxu0
        %v609 = vadd.f32 %v509, %v608
        %v610 = vpop.f32.mrb[0].mxu0
        %v611 = vadd.f32 %v509, %v610
        %612 = vdwg.mxu0
        %v613 = vmax.f32 %v591, 0.0
        %v614 = vmax.f32 %v593, 0.0
        %v615 = vmax.f32 %v597, 0.0
        %v616 = vmax.f32 %v599, 0.0
        %v617 = vmax.f32 %v603, 0.0
        %v618 = vmax.f32 %v605, 0.0
        %v619 = vmax.f32 %v609, 0.0
        %v620 = vmax.f32 %v611, 0.0
        %621 = vrot.lane.b32.xlu0 %v613, 1
        %v622 = vpop.permute.xlu0 %621
        %623 = vrot.lane.b32.xlu0 %v615, 1
        %v624 = vpop.permute.xlu0 %623
        %625 = vrot.lane.b32.xlu0 %v617, 1
        %v626 = vpop.permute.xlu0 %625
        %627 = vrot.lane.b32.xlu0 %v619, 1
        %v628 = vpop.permute.xlu0 %627
        %629 = vrot.lane.b32.xlu0 %v614, 1
        %v630 = vpop.permute.xlu0 %629
        %631 = vrot.lane.b32.xlu0 %v616, 1
        %v632 = vpop.permute.xlu0 %631
        %633 = vrot.lane.b32.xlu0 %v618, 1
        %v634 = vpop.permute.xlu0 %633
        %635 = vrot.lane.b32.xlu0 %v620, 1
        %v636 = vpop.permute.xlu0 %635
        %v637 = vsel %vm281, %v622, %v630
        %v638 = vsel %vm281, %v624, %v632
        %v639 = vsel %vm281, %v626, %v634
        %v640 = vsel %vm281, %v628, %v636
        %v641 = vsel %vm281, %v630, %v622
        %v642 = vsel %vm281, %v632, %v624
        %v643 = vsel %vm281, %v634, %v626
        %v644 = vsel %vm281, %v636, %v628
        %v645 = vsel %vm292, 0.0, %v641
        %v646 = vsel %vm293, 0.0, %v637
        %v647 = vsel %vm292, 0.0, %v642
        %v648 = vsel %vm293, 0.0, %v638
        %v649 = vsel %vm292, 0.0, %v643
        %v650 = vsel %vm293, 0.0, %v639
        %v651 = vsel %vm292, 0.0, %v644
        %v652 = vsel %vm293, 0.0, %v640
        %653 = vrot.lane.b32.xlu0 %v613, 127
        %v654 = vpop.permute.xlu0 %653
        %655 = vrot.lane.b32.xlu0 %v615, 127
        %v656 = vpop.permute.xlu0 %655
        %657 = vrot.lane.b32.xlu0 %v617, 127
        %v658 = vpop.permute.xlu0 %657
        %659 = vrot.lane.b32.xlu0 %v619, 127
        %v660 = vpop.permute.xlu0 %659
        %661 = vrot.lane.b32.xlu0 %v614, 127
        %v662 = vpop.permute.xlu0 %661
        %663 = vrot.lane.b32.xlu0 %v616, 127
        %v664 = vpop.permute.xlu0 %663
        %665 = vrot.lane.b32.xlu0 %v618, 127
        %v666 = vpop.permute.xlu0 %665
        %667 = vrot.lane.b32.xlu0 %v620, 127
        %v668 = vpop.permute.xlu0 %667
        %v669 = vsel %vm318, %v654, %v662
        %v670 = vsel %vm318, %v656, %v664
        %v671 = vsel %vm318, %v658, %v666
        %v672 = vsel %vm318, %v660, %v668
        %v673 = vsel %vm318, %v662, %v654
        %v674 = vsel %vm318, %v664, %v656
        %v675 = vsel %vm318, %v666, %v658
        %v676 = vsel %vm318, %v668, %v660
        %v677 = vsel %vm329, 0.0, %v669
        %v678 = vsel %vm330, 0.0, %v673
        %v679 = vsel %vm329, 0.0, %v670
        %v680 = vsel %vm330, 0.0, %v674
        %v681 = vsel %vm329, 0.0, %v671
        %v682 = vsel %vm330, 0.0, %v675
        %v683 = vsel %vm329, 0.0, %v672
        %v684 = vsel %vm330, 0.0, %v676
        %685 = vset.pattern.permute.xlu0 0
        %686 = vperm.xlu0 %685, %v261
        %v687 = vpop.permute.xlu0 %686
        %689 = vset.pattern.permute.xlu0 0
        %690 = vperm.xlu0 %689, %v262
        %v691 = vpop.permute.xlu0 %690
        %693 = vset.pattern.permute.xlu0 0
        %694 = vperm.xlu0 %693, %v263
        %v695 = vpop.permute.xlu0 %694
        %697 = vset.pattern.permute.xlu0 0
        %698 = vperm.xlu0 %697, %v264
        %v699 = vpop.permute.xlu0 %698
        %v701 = vmul.f32 %v687, %v645
        %v702 = vmul.f32 %v687, %v646
        %v703 = vmul.f32 %v691, %v647
        %v704 = vmul.f32 %v691, %v648
        %v705 = vmul.f32 %v695, %v649
        %v706 = vmul.f32 %v695, %v650
        %v707 = vmul.f32 %v699, %v651
        %v708 = vmul.f32 %v699, %v652
        %709 = vset.pattern.permute.xlu0 1
        %710 = vperm.xlu0 %709, %v261
        %v711 = vpop.permute.xlu0 %710
        %713 = vset.pattern.permute.xlu0 1
        %714 = vperm.xlu0 %713, %v262
        %v715 = vpop.permute.xlu0 %714
        %717 = vset.pattern.permute.xlu0 1
        %718 = vperm.xlu0 %717, %v263
        %v719 = vpop.permute.xlu0 %718
        %721 = vset.pattern.permute.xlu0 1
        %722 = vperm.xlu0 %721, %v264
        %v723 = vpop.permute.xlu0 %722
        %v725 = vmul.f32 %v711, %v613
        %v726 = vmul.f32 %v711, %v614
        %v727 = vmul.f32 %v715, %v615
        %v728 = vmul.f32 %v715, %v616
        %v729 = vmul.f32 %v719, %v617
        %v730 = vmul.f32 %v719, %v618
        %v731 = vmul.f32 %v723, %v619
        %v732 = vmul.f32 %v723, %v620
        %v733 = vadd.f32 %v701, %v725
        %v734 = vadd.f32 %v702, %v726
        %v735 = vadd.f32 %v703, %v727
        %v736 = vadd.f32 %v704, %v728
        %v737 = vadd.f32 %v705, %v729
        %v738 = vadd.f32 %v706, %v730
        %v739 = vadd.f32 %v707, %v731
        %v740 = vadd.f32 %v708, %v732
        %741 = vset.pattern.permute.xlu0 2
        %742 = vperm.xlu0 %741, %v261
        %v743 = vpop.permute.xlu0 %742
        %745 = vset.pattern.permute.xlu0 2
        %746 = vperm.xlu0 %745, %v262
        %v747 = vpop.permute.xlu0 %746
        %749 = vset.pattern.permute.xlu0 2
        %750 = vperm.xlu0 %749, %v263
        %v751 = vpop.permute.xlu0 %750
        %753 = vset.pattern.permute.xlu0 2
        %754 = vperm.xlu0 %753, %v264
        %v755 = vpop.permute.xlu0 %754
        %v757 = vmul.f32 %v743, %v677
        %v758 = vmul.f32 %v743, %v678
        %v759 = vmul.f32 %v747, %v679
        %v760 = vmul.f32 %v747, %v680
        %v761 = vmul.f32 %v751, %v681
        %v762 = vmul.f32 %v751, %v682
        %v763 = vmul.f32 %v755, %v683
        %v764 = vmul.f32 %v755, %v684
        %v765 = vadd.f32 %v733, %v757
        %v766 = vadd.f32 %v734, %v758
        %v767 = vadd.f32 %v735, %v759
        %v768 = vadd.f32 %v736, %v760
        %v769 = vadd.f32 %v737, %v761
        %v770 = vadd.f32 %v738, %v762
        %v771 = vadd.f32 %v739, %v763
        %v772 = vadd.f32 %v740, %v764
        %773 = vset.pattern.permute.xlu0 3
        %774 = vperm.xlu0 %773, %v261
        %v775 = vpop.permute.xlu0 %774
        %777 = vset.pattern.permute.xlu0 3
        %778 = vperm.xlu0 %777, %v262
        %v779 = vpop.permute.xlu0 %778
        %781 = vset.pattern.permute.xlu0 3
        %782 = vperm.xlu0 %781, %v263
        %v783 = vpop.permute.xlu0 %782
        %785 = vset.pattern.permute.xlu0 3
        %786 = vperm.xlu0 %785, %v264
        %v787 = vpop.permute.xlu0 %786
        %v789 = vmul.f32 %v765, %v775
        %v790 = vmul.f32 %v766, %v775
        %v791 = vmul.f32 %v767, %v779
        %v792 = vmul.f32 %v768, %v779
        %v793 = vmul.f32 %v769, %v783
        %v794 = vmul.f32 %v770, %v783
        %v795 = vmul.f32 %v771, %v787
        %v796 = vmul.f32 %v772, %v787
        %797 = vset.pattern.permute.xlu0 4
        %798 = vperm.xlu0 %797, %v261
        %v799 = vpop.permute.xlu0 %798
        %801 = vset.pattern.permute.xlu0 4
        %802 = vperm.xlu0 %801, %v262
        %v803 = vpop.permute.xlu0 %802
        %805 = vset.pattern.permute.xlu0 4
        %806 = vperm.xlu0 %805, %v263
        %v807 = vpop.permute.xlu0 %806
        %809 = vset.pattern.permute.xlu0 4
        %810 = vperm.xlu0 %809, %v264
        %v811 = vpop.permute.xlu0 %810
        %v813 = vadd.f32 %v789, %v799
        %v814 = vadd.f32 %v790, %v799
        %v815 = vadd.f32 %v791, %v803
        %v816 = vadd.f32 %v792, %v803
        %v817 = vadd.f32 %v793, %v807
        %v818 = vadd.f32 %v794, %v807
        %v819 = vadd.f32 %v795, %v811
        %v820 = vadd.f32 %v796, %v811
        %v821 = vadd.f32 %v813, %v218
        %v822 = vadd.f32 %v814, %v219
        %v823 = vadd.f32 %v815, %v220
        %v824 = vadd.f32 %v816, %v221
        %v825 = vadd.f32 %v817, %v222
        %v826 = vadd.f32 %v818, %v223
        %v827 = vadd.f32 %v819, %v224
        %v828 = vadd.f32 %v820, %v225
        %829 = vst [vmem:[%s215] sm:$0xff] %v821
        %830 = vst [vmem:[%s215 + $0x8] sm:$0xff] %v822
        %831 = vst [vmem:[%s215 + $0x10] sm:$0xff] %v823
        %832 = vst [vmem:[%s215 + $0x18] sm:$0xff] %v824
        %833 = vst [vmem:[%s215 + $0x20] sm:$0xff] %v825
        %834 = vst [vmem:[%s215 + $0x28] sm:$0xff] %v826
        %835 = vst [vmem:[%s215 + $0x30] sm:$0xff] %v827
        %836 = vst [vmem:[%s215 + $0x38] sm:$0xff] %v828
        %s837 = sand.u32 %s118, 1
        %s838 = scalar_lea.sflag [#allocation4], %s837
        %s839 = sand.u32 %s118, 1
        %s840 = smul.addr %s839, 64
        %s841 = scalar_lea.vmem [#allocation5], %s840
        // Predicated region
        $region41: #{tpu_custom_call.1} parent=35 // pred_check
          %p842 = pneg %p128
        $region42: #{tpu_custom_call.1} parent=35 // pred_check_branch
          %844 = sbr.rel (%p842) target = $region44
        $region43: #{tpu_custom_call.1} parent=35 // pred_region
          %s845 = smul.u32 2, %s21
          %s847 = ssub.s32 1024, 1024
          %848 = vsyncadd %s838, %s847
          %s849 = smul.addr %s845, 128
          %s850 = scalar_lea.hbm %s4, %s849
          %s851 = sshll.u32 %s841, 4
          %s852 = int_to_ptr.vmem [resolvable:$true] %s851
          %857 = dma.vmem_to_hbm [thread:$0]  %s852, 1024, %s850, %s838, 256, 512, 16
        $region44: #{tpu_custom_call.1} parent=35 // pred_fallthru
          _
      $region36: #{tpu_custom_call.1} parent=5 // pred_fallthru
        _
      %p858 = scmp.le.s32.totalorder 2, %s16
      // Predicated region
      $region45: #{tpu_custom_call.1} parent=5 // pred_check
        %p859 = pneg %p858
      $region46: #{tpu_custom_call.1} parent=5 // pred_check_branch
        %861 = sbr.rel (%p859) target = $region48
      $region47: #{tpu_custom_call.1} parent=5 // pred_region
        %s862 = ssub.s32 %s16, 2
        // Predicated region
        $region49: #{tpu_custom_call.1} parent=47 // pred_check
          %p863 = pneg %p134
        $region50: #{tpu_custom_call.1} parent=47 // pred_check_branch
          %865 = sbr.rel (%p863) target = $region52
        $region51: #{tpu_custom_call.1} parent=47 // pred_region
          %s866 = sand.u32 %s119, 1
          %s867 = scalar_lea.sflag [#allocation4], %s866
          %s868 = sand.u32 %s119, 1
          %s869 = smul.addr %s868, 64
          %s870 = scalar_lea.vmem [#allocation5], %s869
          %871 = dma.done %s867, 1024
        $region52: #{tpu_custom_call.1} parent=47 // pred_fallthru
          _
      $region48: #{tpu_custom_call.1} parent=5 // pred_fallthru
        _
    $region6: #{tpu_custom_call.1} parent=1 // loop_footer
      %s20 = sadd.s32 1, %s16
    $region7: #{tpu_custom_call.1} parent=1 // loop_footer_branch
      %15 = sbr.rel target = $region3
    $region8: #{tpu_custom_call.1} parent=1 // loop_exit
      _
    %872 = vsyncpa [#allocation3], 1
    %s873 = scalar_lea.sflag [#allocation3], 1
    %874 = vsyncpa %s873, 1
    %875 = vsyncpa [#allocation4], 1
    %s876 = scalar_lea.sflag [#allocation4], 1
    %877 = vsyncpa %s876, 1

</llo_original>
